<compile_context>
chip_gen: v7x
topology: tpu7x:2x2x1
jax: 0.10.0
libtpu: 0.0.40
codegen_flags: <defaults>
</compile_context>

<pallas_src>
import functools

import jax
import jax.numpy as jnp
from jax import lax
from jax.experimental import pallas as pl
from jax.experimental.pallas import tpu as pltpu


def _round_up(x, m):
    return ((x + m - 1) // m) * m


def _cdiv(a, b):
    return -(-a // b)


def _mlp_kernel(x_ref, w1_ref, b1_ref, w2_ref, b2_ref, o_ref, *,
                n_chunks, chunk, compute_dtype):
    """All-VPU MLP tile, chunked over lanes so h never spills.

    x_ref:  [2, TB]  input: features on sublanes, batch on lanes (lane-dense)
    w1_ref: [H, 2]   layer-1 weight (PyTorch [out, in] layout)
    b1_ref: [H, 1]
    w2_ref: [H, 2]   layer-2 weight pre-transposed to [in, out]
    b2_ref: [2, 1]
    o_ref:  [2, TB]  output: features on sublanes, batch on lanes
    """
    # Loop-invariant parameter loads (a handful of vregs), hoisted out of the
    # chunk loop.
    w10 = w1_ref[:, 0:1]                              # [H, 1]
    w11 = w1_ref[:, 1:2]                              # [H, 1]
    b1 = b1_ref[...]                                  # [H, 1]
    w20 = w2_ref[:, 0:1].astype(compute_dtype)        # [H, 1]
    w21 = w2_ref[:, 1:2].astype(compute_dtype)        # [H, 1]
    b2_0 = b2_ref[0:1, :]                             # [1, 1]
    b2_1 = b2_ref[1:2, :]                             # [1, 1]

    def body(c, carry):
        start = pl.multiple_of(c * chunk, chunk)
        x0 = x_ref[0:1, pl.ds(start, chunk)]          # [1, chunk]
        x1 = x_ref[1:2, pl.ds(start, chunk)]          # [1, chunk]

        # Layer 1 (broadcast FMAs on the VPU) + tanh (EUP).  The chunk is
        # sized so [H, chunk] stays comfortably in the vreg file.
        a = w10 * x0 + w11 * x1 + b1                  # [H, chunk] f32
        h = jnp.tanh(a.astype(compute_dtype))         # [H, chunk]

        # Layer 2: both output features fused into a single pass over h while
        # it is live in registers; sublane reduce on the XLU, f32 accumulate.
        out0 = jnp.sum((w20 * h).astype(jnp.float32), axis=0, keepdims=True) + b2_0
        out1 = jnp.sum((w21 * h).astype(jnp.float32), axis=0, keepdims=True) + b2_1

        # Single full-width, lane-dense store of the [2, chunk] result.
        o_ref[:, pl.ds(start, chunk)] = jnp.concatenate(
            [out0, out1], axis=0).astype(o_ref.dtype)
        return carry

    lax.fori_loop(0, n_chunks, body, None,
                  unroll=True if n_chunks <= 16 else 8)


def prepare_mlp_params(w1, b1, w2, b2):
    """One-time layout plumbing, hoisted out of the per-call path.

    w1: [H, 2] (PyTorch Linear.weight, [out, in]) -- kept as-is
    b1: [H]    -> [H, 1]
    w2: [2, H] -> [H, 2] (pre-transposed so the kernel reads output columns)
    b2: [2]    -> [2, 1]
    """
    H = w1.shape[0]
    return (
        jnp.asarray(w1, jnp.float32),
        jnp.asarray(b1, jnp.float32).reshape(H, 1),
        jnp.asarray(w2, jnp.float32).T,
        jnp.asarray(b2, jnp.float32).reshape(2, 1),
    )


def _tile_plan(batch, hidden, max_tile):
    """Pick (tb, chunk, n_steps, b_pad): big VMEM-capped batch tiles, near-equal
    128-aligned split, >= 2 grid steps for megacore, vreg-sized lane chunks."""
    b128 = _round_up(max(batch, 1), 128)

    # VMEM-derived cap: x/out double buffers cost 2 arrays * 2 bufs * 2 rows
    # * tb * 4 B = 32*tb bytes; keep them under ~1/8 of VMEM (64 MiB on v7x,
    # 128 MiB on v5e/v6e).
    try:
        info = pltpu.get_tpu_info()
        vmem_bytes = int(getattr(info, "vmem_capacity_bytes", 64 * 1024 * 1024))
    except Exception:
        vmem_bytes = 64 * 1024 * 1024  # conservative (v7x-sized) fallback
    tb_cap = max(128, ((vmem_bytes // 8) // 32) // 128 * 128)
    tb_max = min(max_tile, tb_cap)

    # Grid steps: at least 2 (rounded to even) when there is enough work so
    # dimension_semantics=("parallel",) splits across both v7x TensorCores.
    n = _cdiv(b128, tb_max)
    if b128 >= 256:
        n = max(n, 2)
    if n > 1 and n % 2 == 1:
        n += 1

    # Near-equal 128-aligned tiles (minimal padding waste vs round_up(B, tb)).
    tb = _round_up(_cdiv(b128, n), 128)

    # In-kernel lane chunk: keep [H, chunk] hidden activation within ~8 vregs.
    chunk = max(128, min(512, (8192 // max(hidden, 1)) // 128 * 128))
    chunk = min(chunk, tb)
    tb = _round_up(tb, chunk)

    b_pad = n * tb
    return tb, chunk, n, b_pad


def mlp_forward(x, params, *, max_tile=32768, compute_dtype=jnp.float32):
    """Pallas MLP forward.  x: [B, 2] float32 -> [B, 2].

    compute_dtype=jnp.bfloat16 enables the bf16 tanh/layer-2 path (v6e/v7x
    have bf16 VPU/EUP); keep float32 on v5e.
    """
    w1, b1, w2_t, b2 = params
    H = w1.shape[0]
    B = x.shape[0]

    tb, chunk, n_steps, b_pad = _tile_plan(B, H, max_tile)

    # Batch onto the 128-lane axis ([B,2] -> [2,B]) and zero-pad to n_steps*tb.
    # Note: this HBM-side transpose (and the one on the way out) is an extra
    # XLA copy around a compute-bound kernel; removing it would need an
    # in-kernel lane de-interleave of the row-major [B,2] layout.
    x_t = jnp.transpose(x)
    if b_pad != B:
        x_t = jnp.pad(x_t, ((0, 0), (0, b_pad - B)))

    kernel = functools.partial(
        _mlp_kernel, n_chunks=tb // chunk, chunk=chunk, compute_dtype=compute_dtype)

    out_t = pl.pallas_call(
        kernel,
        out_shape=jax.ShapeDtypeStruct((2, b_pad), x.dtype),
        grid=(n_steps,),
        in_specs=[
            pl.BlockSpec((2, tb), lambda i: (0, i)),     # x tile: lane-dense
            pl.BlockSpec((H, 2), lambda i: (0, 0)),      # params replicated
            pl.BlockSpec((H, 1), lambda i: (0, 0)),
            pl.BlockSpec((H, 2), lambda i: (0, 0)),
            pl.BlockSpec((2, 1), lambda i: (0, 0)),
        ],
        out_specs=pl.BlockSpec((2, tb), lambda i: (0, i)),
        compiler_params=pltpu.CompilerParams(
            dimension_semantics=("parallel",),           # megacore sharding on v7x
            vmem_limit_bytes=32 * 1024 * 1024,           # safe on v5e/v6e/v7x
        ),
    )(x_t, w1, b1, w2_t, b2)

    return jnp.transpose(out_t[:, :B])                   # back to [B, 2]


def _ref_forward(x, w1, b1, w2, b2):
    # Pure-JAX reference (matches PyTorch nn.Linear semantics).
    h = jnp.tanh(x @ w1.T + b1)
    return h @ w2.T + b2


if __name__ == "__main__":
    hidden_size = 32

    key = jax.random.PRNGKey(0)
    k_x, k_w1, k_b1, k_w2, k_b2 = jax.random.split(key, 5)

    # Deterministic parameter init mimicking PyTorch Linear's
    # U(-1/sqrt(fan_in), 1/sqrt(fan_in)) default.
    bound1 = 1.0 / jnp.sqrt(2.0)
    w1 = jax.random.uniform(k_w1, (hidden_size, 2), jnp.float32, -bound1, bound1)
    b1 = jax.random.uniform(k_b1, (hidden_size,), jnp.float32, -bound1, bound1)
    bound2 = 1.0 / jnp.sqrt(float(hidden_size))
    w2 = jax.random.uniform(k_w2, (2, hidden_size), jnp.float32, -bound2, bound2)
    b2 = jax.random.uniform(k_b2, (2,), jnp.float32, -bound2, bound2)

    params = prepare_mlp_params(w1, b1, w2, b2)   # one-time layout plumbing

    # Small batch plus a non-128-multiple batch that exercises multi-step grid,
    # multi-chunk inner loop and padding slicing.
    for batch in (8, 1000):
        x = jax.random.normal(jax.random.fold_in(k_x, batch), (batch, 2),
                              dtype=jnp.float32)
        out = jax.block_until_ready(mlp_forward(x, params))
        ref = _ref_forward(x, w1, b1, w2, b2)
        assert out.shape == (batch, 2)
        assert jnp.allclose(out, ref, atol=1e-5, rtol=1e-5), \
            f"mismatch vs JAX reference at batch={batch}"

    print("KERNEL_OK")
</pallas_src>

<mosaic_0001>
module attributes {stable_mosaic.version = 11 : i64} {
  func.func @_mlp_kernel(%arg0: i32, %arg1: memref<2x128xf32, #tpu.memory_space<vmem>>, %arg2: memref<32x2xf32, #tpu.memory_space<vmem>>, %arg3: memref<32x1xf32, #tpu.memory_space<vmem>>, %arg4: memref<32x2xf32, #tpu.memory_space<vmem>>, %arg5: memref<2x1xf32, #tpu.memory_space<vmem>>, %arg6: memref<2x128xf32, #tpu.memory_space<vmem>>) attributes {dimension_semantics = [#tpu.dimension_semantics<parallel>], iteration_bounds = array<i64: 1>, scalar_prefetch = 0 : i64, scratch_operands = 0 : i64, tpu.core_type = #tpu.core_type<tc>, window_params = [{transform_indices = @transform_0, window_bounds = array<i64: 2, 128>}, {pipeline_mode = #tpu.pipeline_mode<synchronous>, transform_indices = @transform_1, window_bounds = array<i64: 32, 2>}, {pipeline_mode = #tpu.pipeline_mode<synchronous>, transform_indices = @transform_2, window_bounds = array<i64: 32, 1>}, {pipeline_mode = #tpu.pipeline_mode<synchronous>, transform_indices = @transform_3, window_bounds = array<i64: 32, 2>}, {pipeline_mode = #tpu.pipeline_mode<synchronous>, transform_indices = @transform_4, window_bounds = array<i64: 2, 1>}, {transform_indices = @transform_5, window_bounds = array<i64: 2, 128>}]} {
    %c0 = arith.constant 0 : index
    %c0_0 = arith.constant 0 : index
    %0 = vector.load %arg2[%c0, %c0_0] : memref<32x2xf32, #tpu.memory_space<vmem>>, vector<32x1xf32>
    %c0_1 = arith.constant 0 : index
    %c1 = arith.constant 1 : index
    %1 = vector.load %arg2[%c0_1, %c1] : memref<32x2xf32, #tpu.memory_space<vmem>>, vector<32x1xf32>
    %c0_2 = arith.constant 0 : index
    %c0_3 = arith.constant 0 : index
    %2 = vector.load %arg3[%c0_2, %c0_3] : memref<32x1xf32, #tpu.memory_space<vmem>>, vector<32x1xf32>
    %c0_4 = arith.constant 0 : index
    %c0_5 = arith.constant 0 : index
    %3 = vector.load %arg4[%c0_4, %c0_5] : memref<32x2xf32, #tpu.memory_space<vmem>>, vector<32x1xf32>
    %c0_6 = arith.constant 0 : index
    %c1_7 = arith.constant 1 : index
    %4 = vector.load %arg4[%c0_6, %c1_7] : memref<32x2xf32, #tpu.memory_space<vmem>>, vector<32x1xf32>
    %c0_8 = arith.constant 0 : index
    %c0_9 = arith.constant 0 : index
    %5 = vector.load %arg5[%c0_8, %c0_9] : memref<2x1xf32, #tpu.memory_space<vmem>>, vector<1x1xf32>
    %c1_10 = arith.constant 1 : index
    %c0_11 = arith.constant 0 : index
    %6 = vector.load %arg5[%c1_10, %c0_11] : memref<2x1xf32, #tpu.memory_space<vmem>>, vector<1x1xf32>
    %c0_i32 = arith.constant 0 : i32
    %c128_i32 = arith.constant 128 : i32
    %7 = arith.muli %c0_i32, %c128_i32 : i32
    %8 = tpu.assume_multiple %7, 128 : i32
    %c0_12 = arith.constant 0 : index
    %9 = arith.index_cast %8 : i32 to index
    %10 = vector.load %arg1[%c0_12, %9] : memref<2x128xf32, #tpu.memory_space<vmem>>, vector<1x128xf32>
    %c1_13 = arith.constant 1 : index
    %11 = arith.index_cast %8 : i32 to index
    %12 = vector.load %arg1[%c1_13, %11] : memref<2x128xf32, #tpu.memory_space<vmem>>, vector<1x128xf32>
    %13 = vector.broadcast %0 : vector<32x1xf32> to vector<32x128xf32>
    %14 = vector.broadcast %10 : vector<1x128xf32> to vector<32x128xf32>
    %15 = arith.mulf %13, %14 : vector<32x128xf32>
    %16 = vector.broadcast %1 : vector<32x1xf32> to vector<32x128xf32>
    %17 = vector.broadcast %12 : vector<1x128xf32> to vector<32x128xf32>
    %18 = arith.mulf %16, %17 : vector<32x128xf32>
    %19 = arith.addf %15, %18 : vector<32x128xf32>
    %20 = vector.broadcast %2 : vector<32x1xf32> to vector<32x128xf32>
    %21 = arith.addf %19, %20 : vector<32x128xf32>
    %22 = math.tanh %21 : vector<32x128xf32>
    %23 = vector.broadcast %3 : vector<32x1xf32> to vector<32x128xf32>
    %24 = arith.mulf %23, %22 : vector<32x128xf32>
    %cst = arith.constant dense<0.000000e+00> : vector<128xf32>
    %25 = vector.multi_reduction <add>, %24, %cst [0] : vector<32x128xf32> to vector<128xf32>
    %26 = vector.shape_cast %25 : vector<128xf32> to vector<1x128xf32>
    %27 = vector.broadcast %5 : vector<1x1xf32> to vector<1x128xf32>
    %28 = arith.addf %26, %27 : vector<1x128xf32>
    %29 = vector.broadcast %4 : vector<32x1xf32> to vector<32x128xf32>
    %30 = arith.mulf %29, %22 : vector<32x128xf32>
    %cst_14 = arith.constant dense<0.000000e+00> : vector<128xf32>
    %31 = vector.multi_reduction <add>, %30, %cst_14 [0] : vector<32x128xf32> to vector<128xf32>
    %32 = vector.shape_cast %31 : vector<128xf32> to vector<1x128xf32>
    %33 = vector.broadcast %6 : vector<1x1xf32> to vector<1x128xf32>
    %34 = arith.addf %32, %33 : vector<1x128xf32>
    %35 = tpu.concatenate %28, %34 in 0 : vector<1x128xf32>, vector<1x128xf32> -> vector<2x128xf32>
    %c0_15 = arith.constant 0 : index
    %36 = arith.index_cast %8 : i32 to index
    %37 = vector.load %arg6[%c0_15, %36] : memref<2x128xf32, #tpu.memory_space<vmem>>, vector<2x128xf32>
    tpu.vector_store %arg6[%c0_15, %36], %35 {strides = array<i32>} : memref<2x128xf32, #tpu.memory_space<vmem>>, vector<2x128xf32>,
    %c1_i32 = arith.constant 1 : i32
    return
  }
  func.func @transform_0(%arg0: i32) -> (i32, i32) {
    %c0_i32 = arith.constant 0 : i32
    %c0_i32_0 = arith.constant 0 : i32
    return %c0_i32, %arg0 : i32, i32
  }
  func.func @transform_1(%arg0: i32) -> (i32, i32) {
    %c0_i32 = arith.constant 0 : i32
    %c0_i32_0 = arith.constant 0 : i32
    %c0_i32_1 = arith.constant 0 : i32
    return %c0_i32, %c0_i32_0 : i32, i32
  }
  func.func @transform_2(%arg0: i32) -> (i32, i32) {
    %c0_i32 = arith.constant 0 : i32
    %c0_i32_0 = arith.constant 0 : i32
    %c0_i32_1 = arith.constant 0 : i32
    return %c0_i32, %c0_i32_0 : i32, i32
  }
  func.func @transform_3(%arg0: i32) -> (i32, i32) {
    %c0_i32 = arith.constant 0 : i32
    %c0_i32_0 = arith.constant 0 : i32
    %c0_i32_1 = arith.constant 0 : i32
    return %c0_i32, %c0_i32_0 : i32, i32
  }
  func.func @transform_4(%arg0: i32) -> (i32, i32) {
    %c0_i32 = arith.constant 0 : i32
    %c0_i32_0 = arith.constant 0 : i32
    %c0_i32_1 = arith.constant 0 : i32
    return %c0_i32, %c0_i32_0 : i32, i32
  }
  func.func @transform_5(%arg0: i32) -> (i32, i32) {
    %c0_i32 = arith.constant 0 : i32
    %c0_i32_0 = arith.constant 0 : i32
    return %c0_i32, %arg0 : i32, i32
  }
}

</mosaic_0001>

<llo_original>
// kernel: tpu_custom_call.1
$region0: #{tpu_custom_call.1}
  #allocation0 [shape = 'u32[]', space=smem, size = 0x4, offset = 0x4, fixed_abs, tag = 'smem constant byte address 0x4 - core index']
  #allocation1 [shape = 'u32[144,128]{1,0:T(1,128)}', space=vmem, size = 0x12000, scoped, tag = 'internal scratch']
  %s0 = inlined_call_operand.vmem [shape: f32[2,128], index: 0, kind: input, shape index: {}]
  %s1 = inlined_call_operand.vmem [shape: f32[32,2], index: 1, kind: input, shape index: {}]
  %s2 = inlined_call_operand.vmem [shape: f32[32,1], index: 2, kind: input, shape index: {}]
  %s3 = inlined_call_operand.vmem [shape: f32[32,2], index: 3, kind: input, shape index: {}]
  %s4 = inlined_call_operand.vmem [shape: f32[2,1], index: 4, kind: input, shape index: {}]
  %s5 = inlined_call_operand.hbm [shape: f32[2,128], index: 5, kind: output, shape index: {}]
  %s6 = sld [smem:[#allocation0]]
  $region30: #{tpu_custom_call.1} parent=0
    _
  %s8 = ssub.s32 1, %s6
  %s9 = scalar_select 0, %s8, %s6
  $region1: #{tpu_custom_call.1} parent=0
    #allocation2 [shape = 'u8[1024]{0}', space=vmem, size = 0x400, scoped, tag = 'output window, operand 0, single buffered']
    #allocation3 [shape = 's32[1]{0}', space=sflag, size = 0x4, scoped, tag = 'scoped memory for tpu_custom_call.1']
    %10 = vsyncpa [#allocation3], 0
    // Predicated region
    $region2: #{tpu_custom_call.1} parent=1 // pred_check
      _
    $region3: #{tpu_custom_call.1} parent=1 // pred_check_branch
      %12 = sbr.rel (0) target = $region5
    $region4: #{tpu_custom_call.1} parent=1 // pred_region
      _
    $region5: #{tpu_custom_call.1} parent=1 // pred_fallthru
      _
    // Predicated region
    $region6: #{tpu_custom_call.1} parent=1 // pred_check
      _
    $region7: #{tpu_custom_call.1} parent=1 // pred_check_branch
      %14 = sbr.rel (0) target = $region9
    $region8: #{tpu_custom_call.1} parent=1 // pred_region
      _
    $region9: #{tpu_custom_call.1} parent=1 // pred_fallthru
      _
    // Predicated region
    $region10: #{tpu_custom_call.1} parent=1 // pred_check
      _
    $region11: #{tpu_custom_call.1} parent=1 // pred_check_branch
      %16 = sbr.rel (0) target = $region13
    $region12: #{tpu_custom_call.1} parent=1 // pred_region
      _
    $region13: #{tpu_custom_call.1} parent=1 // pred_fallthru
      _
    // Predicated region
    $region14: #{tpu_custom_call.1} parent=1 // pred_check
      _
    $region15: #{tpu_custom_call.1} parent=1 // pred_check_branch
      %18 = sbr.rel (0) target = $region17
    $region16: #{tpu_custom_call.1} parent=1 // pred_region
      _
    $region17: #{tpu_custom_call.1} parent=1 // pred_fallthru
      _
    // Predicated region
    $region18: #{tpu_custom_call.1} parent=1 // pred_check
      _
    $region19: #{tpu_custom_call.1} parent=1 // pred_check_branch
      %20 = sbr.rel (0) target = $region21
    $region20: #{tpu_custom_call.1} parent=1 // pred_region
      _
    $region21: #{tpu_custom_call.1} parent=1 // pred_fallthru
      _
    %v21 = vld [vmem:[%s1] sm:$0xff]
    %v22 = vld [vmem:[%s1 + $0x8] sm:$0xff]
    %v23 = vld [vmem:[%s1 + $0x10] sm:$0xff]
    %v24 = vld [vmem:[%s1 + $0x18] sm:$0xff]
    %v25 = vld [vmem:[%s2] sm:$0xff]
    %v26 = vld [vmem:[%s2 + $0x8] sm:$0xff]
    %v27 = vld [vmem:[%s2 + $0x10] sm:$0xff]
    %v28 = vld [vmem:[%s2 + $0x18] sm:$0xff]
    %v29 = vld [vmem:[%s3] sm:$0xff]
    %v30 = vld [vmem:[%s3 + $0x8] sm:$0xff]
    %v31 = vld [vmem:[%s3 + $0x10] sm:$0xff]
    %v32 = vld [vmem:[%s3 + $0x18] sm:$0xff]
    %v33 = vld [vmem:[%s4] sm:$0x1]
    %v34 = vld [vmem:[%s4 + $0x1] sm:$0x1]
    %v35 = vld [vmem:[%s0] sm:$0x1]
    %v36 = vld [vmem:[%s0 + $0x1] sm:$0x1]
    %38 = vset.pattern.permute.xlu0 0
    %39 = vperm.xlu0 %38, %v21
    %v40 = vpop.permute.xlu0 %39
    %43 = vset.pattern.permute.xlu0 0
    %44 = vperm.xlu0 %43, %v22
    %v45 = vpop.permute.xlu0 %44
    %48 = vset.pattern.permute.xlu0 0
    %49 = vperm.xlu0 %48, %v23
    %v50 = vpop.permute.xlu0 %49
    %53 = vset.pattern.permute.xlu0 0
    %54 = vperm.xlu0 %53, %v24
    %v55 = vpop.permute.xlu0 %54
    %v57 = vlaneseq
    %v58 = vshrl.u32 %v57, 7
    %v59 = vsub.s32 0, %v58
    %v60 = vrot.slane %v35, %v59
    %v61 = vmul.f32 %v40, %v60
    %v62 = vmul.f32 %v45, %v60
    %v63 = vmul.f32 %v50, %v60
    %v64 = vmul.f32 %v55, %v60
    %65 = vset.pattern.permute.xlu0 1
    %66 = vperm.xlu0 %65, %v21
    %v67 = vpop.permute.xlu0 %66
    %69 = vset.pattern.permute.xlu0 1
    %70 = vperm.xlu0 %69, %v22
    %v71 = vpop.permute.xlu0 %70
    %73 = vset.pattern.permute.xlu0 1
    %74 = vperm.xlu0 %73, %v23
    %v75 = vpop.permute.xlu0 %74
    %77 = vset.pattern.permute.xlu0 1
    %78 = vperm.xlu0 %77, %v24
    %v79 = vpop.permute.xlu0 %78
    %v81 = vlaneseq
    %v82 = vshrl.u32 %v81, 7
    %v83 = vsub.s32 0, %v82
    %v84 = vrot.slane %v36, %v83
    %v85 = vmul.f32 %v67, %v84
    %v86 = vmul.f32 %v71, %v84
    %v87 = vmul.f32 %v75, %v84
    %v88 = vmul.f32 %v79, %v84
    %v89 = vadd.f32 %v61, %v85
    %v90 = vadd.f32 %v62, %v86
    %v91 = vadd.f32 %v63, %v87
    %v92 = vadd.f32 %v64, %v88
    %94 = vset.pattern.permute.xlu0 0
    %95 = vperm.xlu0 %94, %v25
    %v96 = vpop.permute.xlu0 %95
    %99 = vset.pattern.permute.xlu0 0
    %100 = vperm.xlu0 %99, %v26
    %v101 = vpop.permute.xlu0 %100
    %104 = vset.pattern.permute.xlu0 0
    %105 = vperm.xlu0 %104, %v27
    %v106 = vpop.permute.xlu0 %105
    %109 = vset.pattern.permute.xlu0 0
    %110 = vperm.xlu0 %109, %v28
    %v111 = vpop.permute.xlu0 %110
    %v113 = vadd.f32 %v89, %v96
    %v114 = vadd.f32 %v90, %v101
    %v115 = vadd.f32 %v91, %v106
    %v116 = vadd.f32 %v92, %v111
    %v117 = vtanh.pop %v113
    %v118 = vtanh.pop %v114
    %v119 = vtanh.pop %v115
    %v120 = vtanh.pop %v116
    %122 = vset.pattern.permute.xlu0 0
    %123 = vperm.xlu0 %122, %v29
    %v124 = vpop.permute.xlu0 %123
    %127 = vset.pattern.permute.xlu0 0
    %128 = vperm.xlu0 %127, %v30
    %v129 = vpop.permute.xlu0 %128
    %132 = vset.pattern.permute.xlu0 0
    %133 = vperm.xlu0 %132, %v31
    %v134 = vpop.permute.xlu0 %133
    %137 = vset.pattern.permute.xlu0 0
    %138 = vperm.xlu0 %137, %v32
    %v139 = vpop.permute.xlu0 %138
    %v141 = vmul.f32 %v124, %v117
    %v142 = vmul.f32 %v129, %v118
    %v143 = vmul.f32 %v134, %v119
    %v144 = vmul.f32 %v139, %v120
    %v145 = vadd.f32 %v141, %v142
    %v146 = vadd.f32 %v145, %v143
    %v147 = vadd.f32 %v146, %v144
    %v148 = vrot.slane %v147, 4
    %v149 = vadd.f32 %v147, %v148
    %v150 = vrot.slane %v149, 2
    %v151 = vadd.f32 %v149, %v150
    %v152 = vrot.slane %v151, 1
    %v153 = vadd.f32 %v151, %v152
    %155 = vset.pattern.permute.xlu0 0
    %156 = vperm.xlu0 %155, %v33
    %v157 = vpop.permute.xlu0 %156
    %v159 = vadd.f32 %v153, %v157
    %160 = vset.pattern.permute.xlu0 1
    %161 = vperm.xlu0 %160, %v29
    %v162 = vpop.permute.xlu0 %161
    %164 = vset.pattern.permute.xlu0 1
    %165 = vperm.xlu0 %164, %v30
    %v166 = vpop.permute.xlu0 %165
    %168 = vset.pattern.permute.xlu0 1
    %169 = vperm.xlu0 %168, %v31
    %v170 = vpop.permute.xlu0 %169
    %172 = vset.pattern.permute.xlu0 1
    %173 = vperm.xlu0 %172, %v32
    %v174 = vpop.permute.xlu0 %173
    %v176 = vmul.f32 %v162, %v117
    %v177 = vmul.f32 %v166, %v118
    %v178 = vmul.f32 %v170, %v119
    %v179 = vmul.f32 %v174, %v120
    %v180 = vadd.f32 %v176, %v177
    %v181 = vadd.f32 %v180, %v178
    %v182 = vadd.f32 %v181, %v179
    %v183 = vrot.slane %v182, 4
    %v184 = vadd.f32 %v182, %v183
    %v185 = vrot.slane %v184, 2
    %v186 = vadd.f32 %v184, %v185
    %v187 = vrot.slane %v186, 1
    %v188 = vadd.f32 %v186, %v187
    %190 = vset.pattern.permute.xlu0 0
    %191 = vperm.xlu0 %190, %v34
    %v192 = vpop.permute.xlu0 %191
    %v194 = vadd.f32 %v188, %v192
    %v196 = vrot.slane %v194, 7
    %vm198 = vcmask 1040384
    %v199 = vsel %vm198, %v159, %v196
    %200 = vst [vmem:[#allocation2] sm:$0x3] %v199
    // Predicated region
    $region22: #{tpu_custom_call.1} parent=1 // pred_check
      _
    $region23: #{tpu_custom_call.1} parent=1 // pred_check_branch
      %202 = sbr.rel (0) target = $region25
    $region24: #{tpu_custom_call.1} parent=1 // pred_region
      %s204 = ssub.s32 32, 32
      %205 = vsyncadd [#allocation3], %s204
      %s207 = sshll.u32 [#allocation2], 4
      %s208 = int_to_ptr.vmem [resolvable:$true] %s207
      %210 = dma.vmem_to_hbm [thread:$0]  %s208, 32, %s5, [#allocation3]
    $region25: #{tpu_custom_call.1} parent=1 // pred_fallthru
      _
    // Predicated region
    $region26: #{tpu_custom_call.1} parent=1 // pred_check
      _
    $region27: #{tpu_custom_call.1} parent=1 // pred_check_branch
      %212 = sbr.rel (0) target = $region29
    $region28: #{tpu_custom_call.1} parent=1 // pred_region
      %213 = dma.done [#allocation3], 32
    $region29: #{tpu_custom_call.1} parent=1 // pred_fallthru
      _
    %214 = vsyncpa [#allocation3], 1

</llo_original>
